<compile_context>
chip_gen: v5e
topology: v5e:2x2
jax: 0.10.0
libtpu: 0.0.40
codegen_flags: <defaults>
</compile_context>

<pallas_src>
import functools

import jax
import jax.numpy as jnp
from jax import lax
from jax.experimental import pallas as pl
from jax.experimental.pallas import tpu as pltpu


# ----------------------------------------------------------------------------
# Pallas kernel: two-phase (stats, normalize) GroupNorm over P tiles.
# Grid = (batch, phase, p_tile); phase/p_tile axes are sequential ("arbitrary").
# ----------------------------------------------------------------------------
def _patch_embed_kernel(patches_ref, w_ref, gmap_ref, gmapt_ref, gamma_ref, beta_ref,
                        o_ref, sum_ref, ssq_ref, scale_ref, shift_ref,
                        *, inv_n, eps):
    phase = pl.program_id(1)
    t = pl.program_id(2)

    @pl.when((phase == 0) & (t == 0))
    def _reset_stats():
        sum_ref[...] = jnp.zeros_like(sum_ref)
        ssq_ref[...] = jnp.zeros_like(ssq_ref)

    # Convolution tile as one MXU matmul, bf16 inputs, f32 accumulation.
    # (Recomputed in phase 1: cheaper than spilling y to HBM at this roofline.)
    y = jnp.dot(patches_ref[0], w_ref[...],
                preferred_element_type=jnp.float32)          # (tile_p, E_pad) f32

    @pl.when(phase == 0)
    def _accumulate():
        sum_ref[...] += jnp.sum(y, axis=0, keepdims=True)    # (1, E_pad)
        ssq_ref[...] += jnp.sum(y * y, axis=0, keepdims=True)

    @pl.when((phase == 1) & (t == 0))
    def _finalize_stats():
        # Channel stats -> group stats -> broadcast back, via the factored map.
        gmap = gmap_ref[...]                                  # (E_pad, G) f32
        gmapt = gmapt_ref[...]                                # (G, E_pad) f32
        gsum = jnp.dot(sum_ref[...], gmap, preferred_element_type=jnp.float32)
        gssq = jnp.dot(ssq_ref[...], gmap, preferred_element_type=jnp.float32)
        mean_c = jnp.dot(gsum, gmapt, preferred_element_type=jnp.float32) * inv_n
        ex2_c = jnp.dot(gssq, gmapt, preferred_element_type=jnp.float32) * inv_n
        var_c = jnp.maximum(ex2_c - mean_c * mean_c, 0.0)     # biased var (torch GN)
        scale = gamma_ref[...] * lax.rsqrt(var_c + eps)       # (1, E_pad)
        scale_ref[...] = scale
        shift_ref[...] = beta_ref[...] - mean_c * scale       # padded chans -> 0

    @pl.when(phase == 1)
    def _normalize():
        o_ref[0] = (y * scale_ref[...] + shift_ref[...]).astype(o_ref.dtype)


# ----------------------------------------------------------------------------
# Wrapper glue: patch extraction, parameter packing, pallas_call wiring.
# ----------------------------------------------------------------------------
def _round_up(x, m):
    return (x + m - 1) // m * m


def _extract_patches_nonoverlap(x, ph, pw):
    """stride == patch: pure reshape + transpose (no gather)."""
    b, c, h, w = x.shape
    ho = (h - ph) // ph + 1
    wo = (w - pw) // pw + 1
    x = x[:, :, :ho * ph, :wo * pw]
    x = x.reshape(b, c, ho, ph, wo, pw)
    patches = jnp.transpose(x, (0, 2, 4, 1, 3, 5)).reshape(b, ho * wo, c * ph * pw)
    return patches, ho, wo


def _extract_patches_gather(x, ph, pw, sh, sw):
    """General (possibly overlapping) patches; fallback path only."""
    b, c, h, w = x.shape
    ho = (h - ph) // sh + 1
    wo = (w - pw) // sw + 1
    ih = (jnp.arange(ho) * sh)[:, None, None, None] + jnp.arange(ph)[None, :, None, None]
    iw = (jnp.arange(wo) * sw)[None, None, :, None] + jnp.arange(pw)[None, None, None, :]
    patches = x[:, :, ih, iw]                               # (B, C, Ho, ph, Wo, pw)
    patches = jnp.transpose(patches, (0, 2, 4, 1, 3, 5)).reshape(b, ho * wo, c * ph * pw)
    return patches, ho, wo


def patch_embed_forward(x, conv_weight, gamma, beta, *, patch_size, patch_stride,
                        num_groups=16, eps=1e-5, out_dtype=jnp.bfloat16,
                        max_tile_p=512, channels_last=False):
    """Equivalent of PatchEmbed.forward on an NCHW tensor."""
    e, c, ph, pw = conv_weight.shape
    assert ph == patch_size and pw == patch_size
    assert e % num_groups == 0
    sh = sw = patch_stride

    # bf16 BEFORE im2col: the extraction copy moves half the bytes.
    x = x.astype(jnp.bfloat16)
    if patch_stride == patch_size:
        patches, ho, wo = _extract_patches_nonoverlap(x, ph, pw)
    else:
        patches, ho, wo = _extract_patches_gather(x, ph, pw, sh, sw)
    b, p, k = patches.shape

    # --- P tiling (pad with zero rows: they add 0 to sum & sum-sq, inv_n uses p) ---
    p8 = _round_up(p, 8)
    num_tiles = max(1, -(-p8 // max_tile_p))
    tile_p = _round_up(-(-p8 // num_tiles), 8)
    p_pad = tile_p * num_tiles
    if p_pad != p:
        patches = jnp.pad(patches, ((0, 0), (0, p_pad - p), (0, 0)))

    e_pad = _round_up(e, 128)                       # lane-dense channel dim
    group_size = e // num_groups

    # (E, C, ph, pw) -> (K, E) -> zero-pad channels to E_pad (padded columns = 0,
    # so the projection produces exactly 0 in padded channels).
    w_mat = jnp.zeros((k, e_pad), jnp.bfloat16).at[:, :e].set(
        conv_weight.reshape(e, k).T.astype(jnp.bfloat16))

    # Factored channel<->group map (rows of padded channels are zero, so they
    # neither contribute to nor receive group statistics).
    grp = jnp.arange(e) // group_size
    gmap_small = (grp[:, None] == jnp.arange(num_groups)[None, :]).astype(jnp.float32)
    gmap = jnp.zeros((e_pad, num_groups), jnp.float32).at[:e, :].set(gmap_small)
    gmapt = gmap.T                                   # (G, E_pad)

    gamma_p = jnp.zeros((1, e_pad), jnp.float32).at[0, :e].set(gamma.astype(jnp.float32))
    beta_p = jnp.zeros((1, e_pad), jnp.float32).at[0, :e].set(beta.astype(jnp.float32))

    inv_n = 1.0 / float(p * group_size)             # real elements per group only
    kernel = functools.partial(_patch_embed_kernel, inv_n=inv_n, eps=float(eps))

    # Scoped-VMEM sizing (per grid step, tiled).  Only raise the limit when the
    # working set exceeds the most conservative (v5e, 16 MiB) default; cap by the
    # chip's actual VMEM capacity rather than a hard-coded number.
    out_itemsize = jnp.dtype(out_dtype).itemsize
    need = (2 * tile_p * k * 2                      # patches block (bf16, double-buffered)
            + 2 * k * e_pad * 2                     # weight (bf16, double-buffered)
            + 2 * 2 * e_pad * num_groups * 4        # gmap + gmapT (f32, double-buffered)
            + 2 * 2 * e_pad * 4                     # gamma + beta
            + 2 * tile_p * e_pad * out_itemsize     # output block (double-buffered)
            + tile_p * e_pad * 4                    # y temporary (f32)
            + 4 * e_pad * 4)                        # stats / scale / shift scratch
    cp_kwargs = dict(dimension_semantics=("parallel", "arbitrary", "arbitrary"))
    if need > (16 << 20):
        try:
            cap = int(pltpu.get_tpu_info().vmem_capacity_bytes)
        except Exception:
            cap = 64 << 20
        cp_kwargs["vmem_limit_bytes"] = int(min(need + (4 << 20), cap))

    out = pl.pallas_call(
        kernel,
        out_shape=jax.ShapeDtypeStruct((b, p_pad, e_pad), out_dtype),
        grid_spec=pltpu.PrefetchScalarGridSpec(
            num_scalar_prefetch=0,
            grid=(b, 2, num_tiles),                 # (batch, phase, p_tile)
            in_specs=[
                pl.BlockSpec((1, tile_p, k), lambda bi, phs, t: (bi, t, 0)),
                pl.BlockSpec((k, e_pad), lambda bi, phs, t: (0, 0)),
                pl.BlockSpec((e_pad, num_groups), lambda bi, phs, t: (0, 0)),
                pl.BlockSpec((num_groups, e_pad), lambda bi, phs, t: (0, 0)),
                pl.BlockSpec((1, e_pad), lambda bi, phs, t: (0, 0)),
                pl.BlockSpec((1, e_pad), lambda bi, phs, t: (0, 0)),
            ],
            # Phase 0 never writes the output; pin its block index to tile 0 so no
            # extra writeback happens, phase 1 fully overwrites every tile.
            out_specs=pl.BlockSpec((1, tile_p, e_pad),
                                   lambda bi, phs, t: (bi, phs * t, 0)),
            scratch_shapes=[pltpu.VMEM((1, e_pad), jnp.float32)] * 4,
        ),
        compiler_params=pltpu.CompilerParams(**cp_kwargs),
    )(patches, w_mat, gmap, gmapt, gamma_p, beta_p)

    # Drop row/channel padding; repack stays in the (bf16) kernel dtype.
    out = out[:, :p, :e].reshape(b, ho, wo, e)
    if channels_last:
        return out                                   # (B, Ho, Wo, E)
    return out.transpose(0, 3, 1, 2)                 # PyTorch NCHW layout


# ----------------------------------------------------------------------------
# Pure-JAX reference (conv + GroupNorm) for correctness checking.
# ----------------------------------------------------------------------------
def _reference_forward(x, conv_weight, gamma, beta, *, patch_stride, num_groups=16,
                       eps=1e-5):
    y = lax.conv_general_dilated(
        x, conv_weight, window_strides=(patch_stride, patch_stride), padding="VALID",
        dimension_numbers=("NCHW", "OIHW", "NCHW"))
    b, c, h, w = y.shape
    yg = y.reshape(b, num_groups, c // num_groups, h, w)
    mean = yg.mean(axis=(2, 3, 4), keepdims=True)
    var = yg.var(axis=(2, 3, 4), keepdims=True)
    yn = ((yg - mean) / jnp.sqrt(var + eps)).reshape(b, c, h, w)
    return yn * gamma.reshape(1, c, 1, 1) + beta.reshape(1, c, 1, 1)


if __name__ == "__main__":
    # Small shapes consistent with the module:
    # batch=2, in_chans=4, spatial=16x16, patch_size=stride=4, embed_dim=32.
    B, C, H, W = 2, 4, 16, 16
    PATCH, STRIDE, EMBED = 4, 4, 32

    key = jax.random.PRNGKey(0)
    kx, kw, kg, kb = jax.random.split(key, 4)
    x = jax.random.normal(kx, (B, C, H, W), dtype=jnp.float32)
    conv_weight = 0.1 * jax.random.normal(kw, (EMBED, C, PATCH, PATCH), dtype=jnp.float32)
    gamma = 1.0 + 0.05 * jax.random.normal(kg, (EMBED,), dtype=jnp.float32)
    beta = 0.05 * jax.random.normal(kb, (EMBED,), dtype=jnp.float32)

    out = patch_embed_forward(x, conv_weight, gamma, beta,
                              patch_size=PATCH, patch_stride=STRIDE)
    out = jax.block_until_ready(out)

    Ho = (H - PATCH) // STRIDE + 1
    Wo = (W - PATCH) // STRIDE + 1
    assert out.shape == (B, EMBED, Ho, Wo), f"bad shape {out.shape}"

    # Reference computed on the same bf16-quantized operands the kernel consumes
    # (accumulation stays f32 in both); tolerance covers the bf16 output store.
    x_q = x.astype(jnp.bfloat16).astype(jnp.float32)
    w_q = conv_weight.astype(jnp.bfloat16).astype(jnp.float32)
    ref = _reference_forward(x_q, w_q, gamma, beta, patch_stride=STRIDE)
    assert jnp.allclose(out.astype(jnp.float32), ref, atol=2e-2, rtol=2e-2), \
        "mismatch vs reference"

    print("KERNEL_OK")
</pallas_src>

<mosaic_0001>
module attributes {stable_mosaic.version = 11 : i64} {
  func.func @_patch_embed_kernel(%arg0: i32, %arg1: i32, %arg2: i32, %arg3: memref<1x16x64xbf16, #tpu.memory_space<vmem>>, %arg4: memref<64x128xbf16, #tpu.memory_space<vmem>>, %arg5: memref<128x16xf32, #tpu.memory_space<vmem>>, %arg6: memref<16x128xf32, #tpu.memory_space<vmem>>, %arg7: memref<1x128xf32, #tpu.memory_space<vmem>>, %arg8: memref<1x128xf32, #tpu.memory_space<vmem>>, %arg9: memref<1x16x128xbf16, #tpu.memory_space<vmem>>, %arg10: memref<1x128xf32, #tpu.memory_space<vmem>>, %arg11: memref<1x128xf32, #tpu.memory_space<vmem>>, %arg12: memref<1x128xf32, #tpu.memory_space<vmem>>, %arg13: memref<1x128xf32, #tpu.memory_space<vmem>>) attributes {dimension_semantics = [#tpu.dimension_semantics<parallel>, #tpu.dimension_semantics<arbitrary>, #tpu.dimension_semantics<arbitrary>], iteration_bounds = array<i64: 2, 2, 1>, scalar_prefetch = 0 : i64, scratch_operands = 4 : i64, tpu.core_type = #tpu.core_type<tc>, window_params = [{transform_indices = @transform_0, window_bounds = array<i64: 1, 16, 64>}, {pipeline_mode = #tpu.pipeline_mode<synchronous>, transform_indices = @transform_1, window_bounds = array<i64: 64, 128>}, {pipeline_mode = #tpu.pipeline_mode<synchronous>, transform_indices = @transform_2, window_bounds = array<i64: 128, 16>}, {pipeline_mode = #tpu.pipeline_mode<synchronous>, transform_indices = @transform_3, window_bounds = array<i64: 16, 128>}, {pipeline_mode = #tpu.pipeline_mode<synchronous>, transform_indices = @transform_4, window_bounds = array<i64: 1, 128>}, {pipeline_mode = #tpu.pipeline_mode<synchronous>, transform_indices = @transform_5, window_bounds = array<i64: 1, 128>}, {transform_indices = @transform_6, window_bounds = array<i64: 1, 16, 128>}]} {
    %c0_i32 = arith.constant 0 : i32
    %0 = arith.cmpi eq, %arg1, %c0_i32 : i32
    %c0_i32_0 = arith.constant 0 : i32
    %1 = arith.cmpi eq, %arg2, %c0_i32_0 : i32
    %2 = arith.andi %0, %1 : i1
    %3 = arith.extui %2 : i1 to i32
    %c0_i32_1 = arith.constant 0 : i32
    %4 = arith.cmpi ne, %3, %c0_i32_1 : i32
    scf.if %4 {
      %cst_12 = arith.constant 0.000000e+00 : f32
      %20 = vector.broadcast %cst_12 : f32 to vector<1x128xf32>
      %c0_13 = arith.constant 0 : index
      %c0_14 = arith.constant 0 : index
      %21 = vector.load %arg10[%c0_13, %c0_14] : memref<1x128xf32, #tpu.memory_space<vmem>>, vector<1x128xf32>
      tpu.vector_store %arg10[%c0_13, %c0_14], %20 {strides = array<i32>} : memref<1x128xf32, #tpu.memory_space<vmem>>, vector<1x128xf32>,
      %cst_15 = arith.constant 0.000000e+00 : f32
      %22 = vector.broadcast %cst_15 : f32 to vector<1x128xf32>
      %c0_16 = arith.constant 0 : index
      %c0_17 = arith.constant 0 : index
      %23 = vector.load %arg11[%c0_16, %c0_17] : memref<1x128xf32, #tpu.memory_space<vmem>>, vector<1x128xf32>
      tpu.vector_store %arg11[%c0_16, %c0_17], %22 {strides = array<i32>} : memref<1x128xf32, #tpu.memory_space<vmem>>, vector<1x128xf32>,
    } else {
    }
    %c0 = arith.constant 0 : index
    %c0_2 = arith.constant 0 : index
    %c0_3 = arith.constant 0 : index
    %5 = vector.load %arg3[%c0, %c0_2, %c0_3] : memref<1x16x64xbf16, #tpu.memory_space<vmem>>, vector<1x16x64xbf16>
    %6 = vector.shape_cast %5 : vector<1x16x64xbf16> to vector<16x64xbf16>
    %c0_4 = arith.constant 0 : index
    %c0_5 = arith.constant 0 : index
    %7 = vector.load %arg4[%c0_4, %c0_5] : memref<64x128xbf16, #tpu.memory_space<vmem>>, vector<64x128xbf16>
    %cst = arith.constant dense<0.000000e+00> : vector<16x128xf32>
    %8 = tpu.matmul %6, %7, %cst {dimension_numbers = #tpu.dot_dimension_numbers<[1], [0], [0], [1], [0, 0, 1, 1], [], []>} : vector<16x64xbf16>, vector<64x128xbf16>, vector<16x128xf32> -> vector<16x128xf32>
    %c0_i32_6 = arith.constant 0 : i32
    %9 = arith.cmpi eq, %arg1, %c0_i32_6 : i32
    %10 = arith.extui %9 : i1 to i32
    %c0_i32_7 = arith.constant 0 : i32
    %11 = arith.cmpi ne, %10, %c0_i32_7 : i32
    scf.if %11 {
      %c0_12 = arith.constant 0 : index
      %c0_13 = arith.constant 0 : index
      %20 = vector.load %arg10[%c0_12, %c0_13] : memref<1x128xf32, #tpu.memory_space<vmem>>, vector<1x128xf32>
      %cst_14 = arith.constant dense<0.000000e+00> : vector<128xf32>
      %21 = vector.multi_reduction <add>, %8, %cst_14 [0] : vector<16x128xf32> to vector<128xf32>
      %22 = vector.shape_cast %21 : vector<128xf32> to vector<1x128xf32>
      %23 = arith.addf %20, %22 : vector<1x128xf32>
      %c0_15 = arith.constant 0 : index
      %c0_16 = arith.constant 0 : index
      %24 = vector.load %arg10[%c0_15, %c0_16] : memref<1x128xf32, #tpu.memory_space<vmem>>, vector<1x128xf32>
      tpu.vector_store %arg10[%c0_15, %c0_16], %23 {strides = array<i32>} : memref<1x128xf32, #tpu.memory_space<vmem>>, vector<1x128xf32>,
      %c0_17 = arith.constant 0 : index
      %c0_18 = arith.constant 0 : index
      %25 = vector.load %arg11[%c0_17, %c0_18] : memref<1x128xf32, #tpu.memory_space<vmem>>, vector<1x128xf32>
      %26 = arith.mulf %8, %8 : vector<16x128xf32>
      %cst_19 = arith.constant dense<0.000000e+00> : vector<128xf32>
      %27 = vector.multi_reduction <add>, %26, %cst_19 [0] : vector<16x128xf32> to vector<128xf32>
      %28 = vector.shape_cast %27 : vector<128xf32> to vector<1x128xf32>
      %29 = arith.addf %25, %28 : vector<1x128xf32>
      %c0_20 = arith.constant 0 : index
      %c0_21 = arith.constant 0 : index
      %30 = vector.load %arg11[%c0_20, %c0_21] : memref<1x128xf32, #tpu.memory_space<vmem>>, vector<1x128xf32>
      tpu.vector_store %arg11[%c0_20, %c0_21], %29 {strides = array<i32>} : memref<1x128xf32, #tpu.memory_space<vmem>>, vector<1x128xf32>,
    } else {
    }
    %c1_i32 = arith.constant 1 : i32
    %12 = arith.cmpi eq, %arg1, %c1_i32 : i32
    %c0_i32_8 = arith.constant 0 : i32
    %13 = arith.cmpi eq, %arg2, %c0_i32_8 : i32
    %14 = arith.andi %12, %13 : i1
    %15 = arith.extui %14 : i1 to i32
    %c0_i32_9 = arith.constant 0 : i32
    %16 = arith.cmpi ne, %15, %c0_i32_9 : i32
    scf.if %16 {
      %c0_12 = arith.constant 0 : index
      %c0_13 = arith.constant 0 : index
      %20 = vector.load %arg5[%c0_12, %c0_13] : memref<128x16xf32, #tpu.memory_space<vmem>>, vector<128x16xf32>
      %c0_14 = arith.constant 0 : index
      %c0_15 = arith.constant 0 : index
      %21 = vector.load %arg6[%c0_14, %c0_15] : memref<16x128xf32, #tpu.memory_space<vmem>>, vector<16x128xf32>
      %c0_16 = arith.constant 0 : index
      %c0_17 = arith.constant 0 : index
      %22 = vector.load %arg10[%c0_16, %c0_17] : memref<1x128xf32, #tpu.memory_space<vmem>>, vector<1x128xf32>
      %cst_18 = arith.constant dense<0.000000e+00> : vector<1x16xf32>
      %23 = tpu.matmul %22, %20, %cst_18 {dimension_numbers = #tpu.dot_dimension_numbers<[1], [0], [0], [1], [0, 0, 1, 1], [], []>} : vector<1x128xf32>, vector<128x16xf32>, vector<1x16xf32> -> vector<1x16xf32>
      %c0_19 = arith.constant 0 : index
      %c0_20 = arith.constant 0 : index
      %24 = vector.load %arg11[%c0_19, %c0_20] : memref<1x128xf32, #tpu.memory_space<vmem>>, vector<1x128xf32>
      %cst_21 = arith.constant dense<0.000000e+00> : vector<1x16xf32>
      %25 = tpu.matmul %24, %20, %cst_21 {dimension_numbers = #tpu.dot_dimension_numbers<[1], [0], [0], [1], [0, 0, 1, 1], [], []>} : vector<1x128xf32>, vector<128x16xf32>, vector<1x16xf32> -> vector<1x16xf32>
      %cst_22 = arith.constant dense<0.000000e+00> : vector<1x128xf32>
      %26 = tpu.matmul %23, %21, %cst_22 {dimension_numbers = #tpu.dot_dimension_numbers<[1], [0], [0], [1], [0, 0, 1, 1], [], []>} : vector<1x16xf32>, vector<16x128xf32>, vector<1x128xf32> -> vector<1x128xf32>
      %cst_23 = arith.constant 3.125000e-02 : f32
      %27 = vector.broadcast %cst_23 : f32 to vector<1x128xf32>
      %28 = arith.mulf %26, %27 : vector<1x128xf32>
      %cst_24 = arith.constant dense<0.000000e+00> : vector<1x128xf32>
      %29 = tpu.matmul %25, %21, %cst_24 {dimension_numbers = #tpu.dot_dimension_numbers<[1], [0], [0], [1], [0, 0, 1, 1], [], []>} : vector<1x16xf32>, vector<16x128xf32>, vector<1x128xf32> -> vector<1x128xf32>
      %cst_25 = arith.constant 3.125000e-02 : f32
      %30 = vector.broadcast %cst_25 : f32 to vector<1x128xf32>
      %31 = arith.mulf %29, %30 : vector<1x128xf32>
      %32 = arith.mulf %28, %28 : vector<1x128xf32>
      %33 = arith.subf %31, %32 : vector<1x128xf32>
      %cst_26 = arith.constant 0.000000e+00 : f32
      %34 = vector.broadcast %cst_26 : f32 to vector<1x128xf32>
      %35 = arith.maximumf %33, %34 : vector<1x128xf32>
      %c0_27 = arith.constant 0 : index
      %c0_28 = arith.constant 0 : index
      %36 = vector.load %arg7[%c0_27, %c0_28] : memref<1x128xf32, #tpu.memory_space<vmem>>, vector<1x128xf32>
      %cst_29 = arith.constant 9.99999974E-6 : f32
      %37 = vector.broadcast %cst_29 : f32 to vector<1x128xf32>
      %38 = arith.addf %35, %37 : vector<1x128xf32>
      %39 = math.rsqrt %38 : vector<1x128xf32>
      %40 = arith.mulf %36, %39 : vector<1x128xf32>
      %c0_30 = arith.constant 0 : index
      %c0_31 = arith.constant 0 : index
      %41 = vector.load %arg12[%c0_30, %c0_31] : memref<1x128xf32, #tpu.memory_space<vmem>>, vector<1x128xf32>
      tpu.vector_store %arg12[%c0_30, %c0_31], %40 {strides = array<i32>} : memref<1x128xf32, #tpu.memory_space<vmem>>, vector<1x128xf32>,
      %c0_32 = arith.constant 0 : index
      %c0_33 = arith.constant 0 : index
      %42 = vector.load %arg8[%c0_32, %c0_33] : memref<1x128xf32, #tpu.memory_space<vmem>>, vector<1x128xf32>
      %43 = arith.mulf %28, %40 : vector<1x128xf32>
      %44 = arith.subf %42, %43 : vector<1x128xf32>
      %c0_34 = arith.constant 0 : index
      %c0_35 = arith.constant 0 : index
      %45 = vector.load %arg13[%c0_34, %c0_35] : memref<1x128xf32, #tpu.memory_space<vmem>>, vector<1x128xf32>
      tpu.vector_store %arg13[%c0_34, %c0_35], %44 {strides = array<i32>} : memref<1x128xf32, #tpu.memory_space<vmem>>, vector<1x128xf32>,
    } else {
    }
    %c1_i32_10 = arith.constant 1 : i32
    %17 = arith.cmpi eq, %arg1, %c1_i32_10 : i32
    %18 = arith.extui %17 : i1 to i32
    %c0_i32_11 = arith.constant 0 : i32
    %19 = arith.cmpi ne, %18, %c0_i32_11 : i32
    scf.if %19 {
      %c0_12 = arith.constant 0 : index
      %c0_13 = arith.constant 0 : index
      %20 = vector.load %arg12[%c0_12, %c0_13] : memref<1x128xf32, #tpu.memory_space<vmem>>, vector<1x128xf32>
      %21 = vector.broadcast %20 : vector<1x128xf32> to vector<16x128xf32>
      %22 = arith.mulf %8, %21 : vector<16x128xf32>
      %c0_14 = arith.constant 0 : index
      %c0_15 = arith.constant 0 : index
      %23 = vector.load %arg13[%c0_14, %c0_15] : memref<1x128xf32, #tpu.memory_space<vmem>>, vector<1x128xf32>
      %24 = vector.broadcast %23 : vector<1x128xf32> to vector<16x128xf32>
      %25 = arith.addf %22, %24 : vector<16x128xf32>
      %26 = arith.truncf %25 : vector<16x128xf32> to vector<16x128xbf16>
      %c0_16 = arith.constant 0 : index
      %c0_17 = arith.constant 0 : index
      %c0_18 = arith.constant 0 : index
      %27 = vector.load %arg9[%c0_16, %c0_17, %c0_18] : memref<1x16x128xbf16, #tpu.memory_space<vmem>>, vector<1x16x128xbf16>
      %28 = vector.shape_cast %27 : vector<1x16x128xbf16> to vector<16x128xbf16>
      %29 = vector.shape_cast %26 : vector<16x128xbf16> to vector<1x16x128xbf16>
      tpu.vector_store %arg9[%c0_16, %c0_17, %c0_18], %29 {strides = array<i32>} : memref<1x16x128xbf16, #tpu.memory_space<vmem>>, vector<1x16x128xbf16>,
    } else {
    }
    return
  }
  func.func @transform_0(%arg0: i32, %arg1: i32, %arg2: i32) -> (i32, i32, i32) {
    %c0_i32 = arith.constant 0 : i32
    %c0_i32_0 = arith.constant 0 : i32
    return %arg0, %arg2, %c0_i32 : i32, i32, i32
  }
  func.func @transform_1(%arg0: i32, %arg1: i32, %arg2: i32) -> (i32, i32) {
    %c0_i32 = arith.constant 0 : i32
    %c0_i32_0 = arith.constant 0 : i32
    %c0_i32_1 = arith.constant 0 : i32
    return %c0_i32, %c0_i32_0 : i32, i32
  }
  func.func @transform_2(%arg0: i32, %arg1: i32, %arg2: i32) -> (i32, i32) {
    %c0_i32 = arith.constant 0 : i32
    %c0_i32_0 = arith.constant 0 : i32
    %c0_i32_1 = arith.constant 0 : i32
    return %c0_i32, %c0_i32_0 : i32, i32
  }
  func.func @transform_3(%arg0: i32, %arg1: i32, %arg2: i32) -> (i32, i32) {
    %c0_i32 = arith.constant 0 : i32
    %c0_i32_0 = arith.constant 0 : i32
    %c0_i32_1 = arith.constant 0 : i32
    return %c0_i32, %c0_i32_0 : i32, i32
  }
  func.func @transform_4(%arg0: i32, %arg1: i32, %arg2: i32) -> (i32, i32) {
    %c0_i32 = arith.constant 0 : i32
    %c0_i32_0 = arith.constant 0 : i32
    %c0_i32_1 = arith.constant 0 : i32
    return %c0_i32, %c0_i32_0 : i32, i32
  }
  func.func @transform_5(%arg0: i32, %arg1: i32, %arg2: i32) -> (i32, i32) {
    %c0_i32 = arith.constant 0 : i32
    %c0_i32_0 = arith.constant 0 : i32
    %c0_i32_1 = arith.constant 0 : i32
    return %c0_i32, %c0_i32_0 : i32, i32
  }
  func.func @transform_6(%arg0: i32, %arg1: i32, %arg2: i32) -> (i32, i32, i32) {
    %0 = arith.muli %arg1, %arg2 : i32
    %c0_i32 = arith.constant 0 : i32
    %c0_i32_0 = arith.constant 0 : i32
    return %arg0, %0, %c0_i32 : i32, i32, i32
  }
}

</mosaic_0001>

<llo_original>
// kernel: tpu_custom_call.1
$region0: #{tpu_custom_call.1}
  #allocation0 [shape = 'u32[]', space=smem, size = 0x4, offset = 0x4, fixed_abs, tag = 'smem constant byte address 0x4 - core index']
  #allocation1 [shape = 'u32[72,128]{1,0:T(1,128)}', space=vmem, size = 0x9000, scoped, tag = 'internal scratch']
  #allocation2 [shape = 'f32[1,128]{1,0:T(1,128)}', space=vmem, size = 0x200, scoped, tag = 'scratch operand']
  #allocation3 [shape = 'f32[1,128]{1,0:T(1,128)}', space=vmem, size = 0x200, scoped, tag = 'scratch operand']
  #allocation4 [shape = 'f32[1,128]{1,0:T(1,128)}', space=vmem, size = 0x200, scoped, tag = 'scratch operand']
  #allocation5 [shape = 'f32[1,128]{1,0:T(1,128)}', space=vmem, size = 0x200, scoped, tag = 'scratch operand']
  %s0 = inlined_call_operand.vmem [shape: bf16[2,16,64], index: 0, kind: input, shape index: {}]
  %s1 = inlined_call_operand.vmem [shape: bf16[64,128], index: 1, kind: input, shape index: {}]
  %s2 = inlined_call_operand.vmem [shape: f32[128,16], index: 2, kind: input, shape index: {}]
  %s3 = inlined_call_operand.vmem [shape: f32[16,128], index: 3, kind: input, shape index: {}]
  %s4 = inlined_call_operand.vmem [shape: f32[1,128], index: 4, kind: input, shape index: {}]
  %s5 = inlined_call_operand.vmem [shape: f32[1,128], index: 5, kind: input, shape index: {}]
  %s6 = inlined_call_operand.hbm [shape: bf16[2,16,128], index: 6, kind: output, shape index: {}]
  %s7 = sld [smem:[#allocation0]]
  $region73: #{tpu_custom_call.1} parent=0
    _
  %s9 = ssub.s32 1, %s7
  %s10 = scalar_select 0, %s9, %s7
  $region1: #{tpu_custom_call.1} parent=0
    #allocation6 [shape = 'u8[8192]{0}', space=vmem, size = 0x2000, scoped, tag = 'output window, operand 0']
    #allocation7 [shape = 's32[2]{0}', space=sflag, size = 0x8, scoped, tag = 'scoped memory for tpu_custom_call.1']
    %11 = vsyncpa [#allocation7], 0
    %s12 = scalar_lea.sflag [#allocation7], 1
    %13 = vsyncpa %s12, 0
    loop: start=0, step=1, limit=6
    $region2: #{tpu_custom_call.1} parent=1 // loop_pre_header
      _
    $region3: #{tpu_custom_call.1} parent=1 // loop_header
      %s15 = sphi 0, %s19
      %p16 = scmp.ge.s32.totalorder %s15, 6
      %s22 = sphi 0, %s41
      %s23 = sphi 0, %s37
      %s24 = sphi 0, %s33
      %s25 = sphi 0, %s22
      %s26 = sphi 0, %s23
      %s27 = sphi 0, %s24
      %s28 = sphi 0, %s25
      %s29 = sphi 0, %s26
      %s30 = sphi 0, %s27
      %s46 = sphi 0, %s48
      %s49 = sphi 0, %s46
      %s50 = sphi 0, %s49
      %s66 = sphi 0, %s50
      %s70 = sphi 0, %s70
      %s72 = sphi 0, %s70
      %s73 = sphi 0, %s72
      %s87 = sphi 0, %s73
      %s91 = sphi 0, %s91
      %s93 = sphi 0, %s91
      %s94 = sphi 0, %s93
      %s108 = sphi 0, %s94
      %s112 = sphi 0, %s112
      %s114 = sphi 0, %s112
      %s115 = sphi 0, %s114
      %s129 = sphi 0, %s115
      %s133 = sphi 0, %s133
      %s135 = sphi 0, %s133
      %s136 = sphi 0, %s135
      %s150 = sphi 0, %s136
      %s154 = sphi 0, %s154
      %s156 = sphi 0, %s154
      %s157 = sphi 0, %s156
      %s171 = sphi 0, %s157
      %s181 = sphi 0, %s183
      %s184 = sphi 0, %s181
      %s185 = sphi 0, %s184
      %s201 = sphi 0, %s185
    $region4: #{tpu_custom_call.1} parent=1 // loop_header_branch
      %18 = sbr.rel (%p16) target = $region8
    $region5: #{tpu_custom_call.1} parent=1 // loop_body
      %s20 = ssub.s32 %s15, 1
      %s21 = ssub.s32 %s15, 2
      %s31 = sadd.s32 1, %s24
      %p32 = scmp.ge.s32.totalorder %s31, 1
      %s33 = scalar_select %p32, 0, %s31
      %s34 = sadd.s32 1, %s23
      %s35 = scalar_select %p32, %s34, %s23
      %p36 = scmp.ge.s32.totalorder %s35, 2
      %s37 = scalar_select %p36, 0, %s35
      %s38 = sadd.s32 1, %s22
      %s39 = scalar_select %p36, %s38, %s22
      %p40 = scmp.ge.s32.totalorder %s39, 2
      %s41 = scalar_select %p40, 0, %s39
      %s42 = ssub.s32 %s22, %s41
      %s43 = ssub.s32 %s24, %s33
      %s44 = sor.u32 %s42, %s43
      %p45 = scmp.eq.s32.totalorder %s44, 0
      %s47 = sadd.s32 %s46, 1
      %s48 = scalar_select %p45, %s46, %s47
      %p51 = pneg %p45
      %p52 = scmp.eq.s32.totalorder %s15, 3
      %p53 = por %p51, %p52
      %p54 = scmp.ne.s32.totalorder %s46, %s49
      %p55 = scmp.eq.s32.totalorder %s15, 0
      %p56 = por %p54, %p55
      %p57 = scmp.ne.s32.totalorder %s46, %s49
      %p58 = scmp.eq.s32.totalorder %s20, 3
      %p59 = por %p57, %p58
      %p60 = scmp.ne.s32.totalorder %s49, %s50
      %p61 = scmp.eq.s32.totalorder %s20, 0
      %p62 = por %p60, %p61
      %p63 = scmp.ne.s32.totalorder %s49, %s50
      %p64 = scmp.eq.s32.totalorder %s21, 3
      %p65 = por %p63, %p64
      %p67 = scmp.ne.s32.totalorder %s50, %s66
      %p68 = scmp.eq.s32.totalorder %s21, 0
      %p69 = por %p67, %p68
      %s71 = sadd.s32 %s70, 1
      %p74 = scmp.eq.s32.totalorder %s15, 3
      %p75 = scmp.ne.s32.totalorder %s70, %s72
      %p76 = scmp.eq.s32.totalorder %s15, 0
      %p77 = por %p75, %p76
      %p78 = scmp.ne.s32.totalorder %s70, %s72
      %p79 = scmp.eq.s32.totalorder %s20, 3
      %p80 = por %p78, %p79
      %p81 = scmp.ne.s32.totalorder %s72, %s73
      %p82 = scmp.eq.s32.totalorder %s20, 0
      %p83 = por %p81, %p82
      %p84 = scmp.ne.s32.totalorder %s72, %s73
      %p85 = scmp.eq.s32.totalorder %s21, 3
      %p86 = por %p84, %p85
      %p88 = scmp.ne.s32.totalorder %s73, %s87
      %p89 = scmp.eq.s32.totalorder %s21, 0
      %p90 = por %p88, %p89
      %s92 = sadd.s32 %s91, 1
      %p95 = scmp.eq.s32.totalorder %s15, 3
      %p96 = scmp.ne.s32.totalorder %s91, %s93
      %p97 = scmp.eq.s32.totalorder %s15, 0
      %p98 = por %p96, %p97
      %p99 = scmp.ne.s32.totalorder %s91, %s93
      %p100 = scmp.eq.s32.totalorder %s20, 3
      %p101 = por %p99, %p100
      %p102 = scmp.ne.s32.totalorder %s93, %s94
      %p103 = scmp.eq.s32.totalorder %s20, 0
      %p104 = por %p102, %p103
      %p105 = scmp.ne.s32.totalorder %s93, %s94
      %p106 = scmp.eq.s32.totalorder %s21, 3
      %p107 = por %p105, %p106
      %p109 = scmp.ne.s32.totalorder %s94, %s108
      %p110 = scmp.eq.s32.totalorder %s21, 0
      %p111 = por %p109, %p110
      %s113 = sadd.s32 %s112, 1
      %p116 = scmp.eq.s32.totalorder %s15, 3
      %p117 = scmp.ne.s32.totalorder %s112, %s114
      %p118 = scmp.eq.s32.totalorder %s15, 0
      %p119 = por %p117, %p118
      %p120 = scmp.ne.s32.totalorder %s112, %s114
      %p121 = scmp.eq.s32.totalorder %s20, 3
      %p122 = por %p120, %p121
      %p123 = scmp.ne.s32.totalorder %s114, %s115
      %p124 = scmp.eq.s32.totalorder %s20, 0
      %p125 = por %p123, %p124
      %p126 = scmp.ne.s32.totalorder %s114, %s115
      %p127 = scmp.eq.s32.totalorder %s21, 3
      %p128 = por %p126, %p127
      %p130 = scmp.ne.s32.totalorder %s115, %s129
      %p131 = scmp.eq.s32.totalorder %s21, 0
      %p132 = por %p130, %p131
      %s134 = sadd.s32 %s133, 1
      %p137 = scmp.eq.s32.totalorder %s15, 3
      %p138 = scmp.ne.s32.totalorder %s133, %s135
      %p139 = scmp.eq.s32.totalorder %s15, 0
      %p140 = por %p138, %p139
      %p141 = scmp.ne.s32.totalorder %s133, %s135
      %p142 = scmp.eq.s32.totalorder %s20, 3
      %p143 = por %p141, %p142
      %p144 = scmp.ne.s32.totalorder %s135, %s136
      %p145 = scmp.eq.s32.totalorder %s20, 0
      %p146 = por %p144, %p145
      %p147 = scmp.ne.s32.totalorder %s135, %s136
      %p148 = scmp.eq.s32.totalorder %s21, 3
      %p149 = por %p147, %p148
      %p151 = scmp.ne.s32.totalorder %s136, %s150
      %p152 = scmp.eq.s32.totalorder %s21, 0
      %p153 = por %p151, %p152
      %s155 = sadd.s32 %s154, 1
      %p158 = scmp.eq.s32.totalorder %s15, 3
      %p159 = scmp.ne.s32.totalorder %s154, %s156
      %p160 = scmp.eq.s32.totalorder %s15, 0
      %p161 = por %p159, %p160
      %p162 = scmp.ne.s32.totalorder %s154, %s156
      %p163 = scmp.eq.s32.totalorder %s20, 3
      %p164 = por %p162, %p163
      %p165 = scmp.ne.s32.totalorder %s156, %s157
      %p166 = scmp.eq.s32.totalorder %s20, 0
      %p167 = por %p165, %p166
      %p168 = scmp.ne.s32.totalorder %s156, %s157
      %p169 = scmp.eq.s32.totalorder %s21, 3
      %p170 = por %p168, %p169
      %p172 = scmp.ne.s32.totalorder %s157, %s171
      %p173 = scmp.eq.s32.totalorder %s21, 0
      %p174 = por %p172, %p173
      %s175 = smul.u32 %s23, %s24
      %s176 = smul.u32 %s37, %s33
      %s177 = ssub.s32 %s22, %s41
      %s178 = ssub.s32 %s175, %s176
      %s179 = sor.u32 %s177, %s178
      %p180 = scmp.eq.s32.totalorder %s179, 0
      %s182 = sadd.s32 %s181, 1
      %s183 = scalar_select %p180, %s181, %s182
      %p186 = pneg %p180
      %p187 = scmp.eq.s32.totalorder %s15, 3
      %p188 = por %p186, %p187
      %p189 = scmp.ne.s32.totalorder %s181, %s184
      %p190 = scmp.eq.s32.totalorder %s15, 0
      %p191 = por %p189, %p190
      %p192 = scmp.ne.s32.totalorder %s181, %s184
      %p193 = scmp.eq.s32.totalorder %s20, 3
      %p194 = por %p192, %p193
      %p195 = scmp.ne.s32.totalorder %s184, %s185
      %p196 = scmp.eq.s32.totalorder %s20, 0
      %p197 = por %p195, %p196
      %p198 = scmp.ne.s32.totalorder %s184, %s185
      %p199 = scmp.eq.s32.totalorder %s21, 3
      %p200 = por %p198, %p199
      %p202 = scmp.ne.s32.totalorder %s185, %s201
      %p203 = scmp.eq.s32.totalorder %s21, 0
      %p204 = por %p202, %p203
      %p205 = scmp.le.s32.totalorder 1, %s15
      %p206 = scmp.lt.s32.totalorder %s15, 5
      %p207 = pnand %p205, %p206
      %p208 = pneg %p207
      // Predicated region
      $region9: #{tpu_custom_call.1} parent=5 // pred_check
        _
      $region10: #{tpu_custom_call.1} parent=5 // pred_check_branch
        %210 = sbr.rel (%p207) target = $region12
      $region11: #{tpu_custom_call.1} parent=5 // pred_region
        %s211 = ssub.s32 %s15, 1
        // Predicated region
        $region13: #{tpu_custom_call.1} parent=11 // pred_check
          %p212 = pneg %p83
        $region14: #{tpu_custom_call.1} parent=11 // pred_check_branch
          %214 = sbr.rel (%p212) target = $region16
        $region15: #{tpu_custom_call.1} parent=11 // pred_region
          _
        $region16: #{tpu_custom_call.1} parent=11 // pred_fallthru
          _
        // Predicated region
        $region17: #{tpu_custom_call.1} parent=11 // pred_check
          %p215 = pneg %p104
        $region18: #{tpu_custom_call.1} parent=11 // pred_check_branch
          %217 = sbr.rel (%p215) target = $region20
        $region19: #{tpu_custom_call.1} parent=11 // pred_region
          _
        $region20: #{tpu_custom_call.1} parent=11 // pred_fallthru
          _
        // Predicated region
        $region21: #{tpu_custom_call.1} parent=11 // pred_check
          %p218 = pneg %p125
        $region22: #{tpu_custom_call.1} parent=11 // pred_check_branch
          %220 = sbr.rel (%p218) target = $region24
        $region23: #{tpu_custom_call.1} parent=11 // pred_region
          _
        $region24: #{tpu_custom_call.1} parent=11 // pred_fallthru
          _
        // Predicated region
        $region25: #{tpu_custom_call.1} parent=11 // pred_check
          %p221 = pneg %p146
        $region26: #{tpu_custom_call.1} parent=11 // pred_check_branch
          %223 = sbr.rel (%p221) target = $region28
        $region27: #{tpu_custom_call.1} parent=11 // pred_region
          _
        $region28: #{tpu_custom_call.1} parent=11 // pred_fallthru
          _
        // Predicated region
        $region29: #{tpu_custom_call.1} parent=11 // pred_check
          %p224 = pneg %p167
        $region30: #{tpu_custom_call.1} parent=11 // pred_check_branch
          %226 = sbr.rel (%p224) target = $region32
        $region31: #{tpu_custom_call.1} parent=11 // pred_region
          _
        $region32: #{tpu_custom_call.1} parent=11 // pred_fallthru
          _
      $region12: #{tpu_custom_call.1} parent=5 // pred_fallthru
        _
      %p227 = scmp.lt.s32.totalorder %s15, 4
      // Predicated region
      $region33: #{tpu_custom_call.1} parent=5 // pred_check
        %p228 = pneg %p227
      $region34: #{tpu_custom_call.1} parent=5 // pred_check_branch
        %230 = sbr.rel (%p228) target = $region36
      $region35: #{tpu_custom_call.1} parent=5 // pred_region
        // Predicated region
        $region37: #{tpu_custom_call.1} parent=35 // pred_check
          %p231 = pneg %p56
        $region38: #{tpu_custom_call.1} parent=35 // pred_check_branch
          %233 = sbr.rel (%p231) target = $region40
        $region39: #{tpu_custom_call.1} parent=35 // pred_region
          %s234 = smul.u32 2, %s24
          %p235 = scmp.lt.s32.totalorder %s22, 1
          %s236 = scalar_select %p235, %s22, 1
          %p237 = scmp.lt.s32.totalorder %s234, 1
          %s238 = scalar_select %p237, %s234, 1
          %s239 = smul.addr %s236, 2
          %s240 = sadd.s32 %s238, %s239
          %s241 = smul.addr %s240, 4
          %s242 = scalar_lea.vmem %s0, %s241
          %s243 = smul.u32 2, %s24
        $region40: #{tpu_custom_call.1} parent=35 // pred_fallthru
          _
      $region36: #{tpu_custom_call.1} parent=5 // pred_fallthru
        _
      %p244 = scmp.le.s32.totalorder 1, %s15
      %p245 = scmp.lt.s32.totalorder %s15, 5
      %p246 = pnand %p244, %p245
      %p247 = pneg %p246
      // Predicated region
      $region41: #{tpu_custom_call.1} parent=5 // pred_check
        _
      $region42: #{tpu_custom_call.1} parent=5 // pred_check_branch
        %249 = sbr.rel (%p246) target = $region44
      $region43: #{tpu_custom_call.1} parent=5 // pred_region
        %s250 = ssub.s32 %s15, 1
        %s251 = smul.u32 2, %s27
        %p252 = scmp.lt.s32.totalorder %s25, 1
        %s253 = scalar_select %p252, %s25, 1
        %p254 = scmp.lt.s32.totalorder %s251, 1
        %s255 = scalar_select %p254, %s251, 1
        %s256 = smul.addr %s253, 2
        %s257 = sadd.s32 %s255, %s256
        %s258 = smul.addr %s257, 4
        %s259 = scalar_lea.vmem %s0, %s258
        %p260 = pneg %p62
        %p261 = pneg %p59
        %p262 = pneg %p83
        %p263 = pneg %p80
        %p264 = pneg %p104
        %p265 = pneg %p101
        %p266 = pneg %p125
        %p267 = pneg %p122
        %p268 = pneg %p146
        %p269 = pneg %p143
        %p270 = pneg %p167
        %p271 = pneg %p164
        %p272 = pneg %p197
        %p273 = pneg %p194
        %s274 = sand.u32 %s184, 1
        %s275 = scalar_lea.sflag [#allocation7], %s274
        %s276 = sand.u32 %s184, 1
        %s277 = smul.addr %s276, 8
        %s278 = scalar_lea.vmem [#allocation6], %s277
        %s279 = smul.u32 2, %s27
        %p280 = scmp.lt.s32.totalorder %s25, 1
        %s281 = scalar_select %p280, %s25, 1
        %p282 = scmp.lt.s32.totalorder %s279, 1
        %s283 = scalar_select %p282, %s279, 1
        %s284 = smul.addr %s281, 2
        %s285 = sadd.s32 %s283, %s284
        %s286 = smul.addr %s285, 4
        %s287 = scalar_lea.vmem %s0, %s286
        %s288 = smul.u32 2, %s27
        %s289 = smul.u32 %s26, %s27
        %s290 = smul.u32 2, %s289
        %p292 = scmp.eq.s32.totalorder %s26, 0
        %p293 = scmp.eq.s32.totalorder %s27, 0
        %p294 = pnand %p292, %p293
        %p295 = pneg %p294
        // Predicated region
        $region45: #{tpu_custom_call.1} parent=43 // pred_check
          _
        $region46: #{tpu_custom_call.1} parent=43 // pred_check_branch
          %297 = sbr.rel (%p294) target = $region48
        $region47: #{tpu_custom_call.1} parent=43 // pred_region
          %298 = vst [vmem:[#allocation2] sm:$0x1] 0.0
          %299 = vst [vmem:[#allocation3] sm:$0x1] 0.0
        $region48: #{tpu_custom_call.1} parent=43 // pred_fallthru
          _
        %v300 = vld [vmem:[%s287] sm:$0xf]
        %v301 = vld [vmem:[%s287 + $0x4] sm:$0xf]
        %v302 = vld [vmem:[%s1] sm:$0xf]
        %v303 = vld [vmem:[%s1 + $0x4] sm:$0xf]
        %v304 = vld [vmem:[%s1 + $0x8] sm:$0xf]
        %v305 = vld [vmem:[%s1 + $0xc] sm:$0xf]
        %v306 = vld [vmem:[%s1 + $0x10] sm:$0xf]
        %v307 = vld [vmem:[%s1 + $0x14] sm:$0xf]
        %v308 = vld [vmem:[%s1 + $0x18] sm:$0xf]
        %v309 = vld [vmem:[%s1 + $0x1c] sm:$0xf]
        %v312 = vunpack.c.l.b16 %v300
        %v313 = vunpack.c.l.b16 %v301
        %v314 = vpack.c.b16 %v313, %v312
        %v323 = vunpack.c.l.b16 %v302
        %v324 = vunpack.c.l.b16 %v303
        %v325 = vunpack.c.l.b16 %v304
        %v326 = vunpack.c.l.b16 %v305
        %v327 = vunpack.c.l.b16 %v306
        %v328 = vunpack.c.l.b16 %v307
        %v329 = vunpack.c.l.b16 %v308
        %v330 = vunpack.c.l.b16 %v309
        %v331 = vpack.c.b16 %v324, %v323
        %v332 = vpack.c.b16 %v326, %v325
        %v333 = vpack.c.b16 %v328, %v327
        %v334 = vpack.c.b16 %v330, %v329
        %vm339 = vcmask 523264
        %v341 = vsel %vm339, %v314, 0
        %343 = vmatpush.bf16.msra.mxu0 0
        %344 = vmatpush.bf16.msra.mxu0 0
        %345 = vmatpush.bf16.msra.mxu0 0
        %346 = vmatpush.bf16.msra.mxu0 0
        %347 = vmatpush.bf16.msra.mxu0 %v334
        %348 = vmatpush.bf16.msra.mxu0 %v333
        %349 = vmatpush.bf16.msra.mxu0 %v332
        %350 = vmatpush.bf16.msra.mxu0 %v331
        %351 = vmatmul.bf16.gmra.mxu0 %v341
        %v352 = vpop.f32.mrf.mxu0
        %v353 = vadd.f32 0.0, %v352
        %v354 = vpop.f32.mrf.mxu0
        %v355 = vadd.f32 0.0, %v354
        %356 = vdwg.mxu0
        // Predicated region
        $region49: #{tpu_custom_call.1} parent=43 // pred_check
          %p357 = pneg %p292
        $region50: #{tpu_custom_call.1} parent=43 // pred_check_branch
          %359 = sbr.rel (%p357) target = $region52
        $region51: #{tpu_custom_call.1} parent=43 // pred_region
          %v360 = vld [vmem:[#allocation2] sm:$0x1]
          %v361 = vadd.f32 %v353, %v355
          %v362 = vrot.slane %v361, 4
          %v363 = vadd.f32 %v361, %v362
          %v364 = vrot.slane %v363, 2
          %v365 = vadd.f32 %v363, %v364
          %v366 = vrot.slane %v365, 1
          %v367 = vadd.f32 %v365, %v366
          %v368 = vadd.f32 %v360, %v367
          %369 = vst [vmem:[#allocation2] sm:$0x1] %v368
          %v370 = vld [vmem:[#allocation3] sm:$0x1]
          %v371 = vmul.f32 %v353, %v353
          %v372 = vmul.f32 %v355, %v355
          %v373 = vadd.f32 %v371, %v372
          %v374 = vrot.slane %v373, 4
          %v375 = vadd.f32 %v373, %v374
          %v376 = vrot.slane %v375, 2
          %v377 = vadd.f32 %v375, %v376
          %v378 = vrot.slane %v377, 1
          %v379 = vadd.f32 %v377, %v378
          %v380 = vadd.f32 %v370, %v379
          %381 = vst [vmem:[#allocation3] sm:$0x1] %v380
        $region52: #{tpu_custom_call.1} parent=43 // pred_fallthru
          _
        %p382 = scmp.eq.s32.totalorder %s26, 1
        %p383 = pnand %p382, %p293
        %p384 = pneg %p383
        // Predicated region
        $region53: #{tpu_custom_call.1} parent=43 // pred_check
          _
        $region54: #{tpu_custom_call.1} parent=43 // pred_check_branch
          %386 = sbr.rel (%p383) target = $region56
        $region55: #{tpu_custom_call.1} parent=43 // pred_region
          %v387 = vld [vmem:[%s2] sm:$0xff]
          %v388 = vld [vmem:[%s2 + $0x8] sm:$0xff]
          %v389 = vld [vmem:[%s2 + $0x10] sm:$0xff]
          %v390 = vld [vmem:[%s2 + $0x18] sm:$0xff]
          %v391 = vld [vmem:[%s2 + $0x20] sm:$0xff]
          %v392 = vld [vmem:[%s2 + $0x28] sm:$0xff]
          %v393 = vld [vmem:[%s2 + $0x30] sm:$0xff]
          %v394 = vld [vmem:[%s2 + $0x38] sm:$0xff]
          %v395 = vld [vmem:[%s2 + $0x40] sm:$0xff]
          %v396 = vld [vmem:[%s2 + $0x48] sm:$0xff]
          %v397 = vld [vmem:[%s2 + $0x50] sm:$0xff]
          %v398 = vld [vmem:[%s2 + $0x58] sm:$0xff]
          %v399 = vld [vmem:[%s2 + $0x60] sm:$0xff]
          %v400 = vld [vmem:[%s2 + $0x68] sm:$0xff]
          %v401 = vld [vmem:[%s2 + $0x70] sm:$0xff]
          %v402 = vld [vmem:[%s2 + $0x78] sm:$0xff]
          %v403 = vld [vmem:[%s3] sm:$0xff]
          %v404 = vld [vmem:[%s3 + $0x8] sm:$0xff]
          %v405 = vld [vmem:[#allocation2] sm:$0x1]
          %406 = vmatpush.msra.mxu0 %v402
          %407 = vmatpush.msra.mxu0 %v401
          %408 = vmatpush.msra.mxu0 %v400
          %409 = vmatpush.msra.mxu0 %v399
          %410 = vmatpush.msra.mxu0 %v398
          %411 = vmatpush.msra.mxu0 %v397
          %412 = vmatpush.msra.mxu0 %v396
          %413 = vmatpush.msra.mxu0 %v395
          %414 = vmatpush.msra.mxu0 %v394
          %415 = vmatpush.msra.mxu0 %v393
          %416 = vmatpush.msra.mxu0 %v392
          %417 = vmatpush.msra.mxu0 %v391
          %418 = vmatpush.msra.mxu0 %v390
          %419 = vmatpush.msra.mxu0 %v389
          %420 = vmatpush.msra.mxu0 %v388
          %421 = vmatpush.msra.mxu0 %v387
          %422 = vmatmul.f32.gmra.mxu0 %v405
          %v423 = vpop.f32.mrf.mxu0
          %v424 = vadd.f32 0.0, %v423
          %425 = vdwg.mxu0
          %v426 = vld [vmem:[#allocation3] sm:$0x1]
          %427 = vmatpush.msra.mxu0 %v402
          %428 = vmatpush.msra.mxu0 %v401
          %429 = vmatpush.msra.mxu0 %v400
          %430 = vmatpush.msra.mxu0 %v399
          %431 = vmatpush.msra.mxu0 %v398
          %432 = vmatpush.msra.mxu0 %v397
          %433 = vmatpush.msra.mxu0 %v396
          %434 = vmatpush.msra.mxu0 %v395
          %435 = vmatpush.msra.mxu0 %v394
          %436 = vmatpush.msra.mxu0 %v393
          %437 = vmatpush.msra.mxu0 %v392
          %438 = vmatpush.msra.mxu0 %v391
          %439 = vmatpush.msra.mxu0 %v390
          %440 = vmatpush.msra.mxu0 %v389
          %441 = vmatpush.msra.mxu0 %v388
          %442 = vmatpush.msra.mxu0 %v387
          %443 = vmatmul.f32.gmra.mxu0 %v426
          %v444 = vpop.f32.mrf.mxu0
          %v445 = vadd.f32 0.0, %v444
          %446 = vdwg.mxu0
          %vm447 = vcmask 130048
          %v449 = vsel %vm447, %v424, 0
          %451 = vmatpush.msra.mxu0 0.0
          %452 = vmatpush.msra.mxu0 0.0
          %453 = vmatpush.msra.mxu0 0.0
          %454 = vmatpush.msra.mxu0 0.0
          %455 = vmatpush.msra.mxu0 0.0
          %456 = vmatpush.msra.mxu0 0.0
          %457 = vmatpush.msra.mxu0 0.0
          %458 = vmatpush.msra.mxu0 0.0
          %459 = vmatpush.msra.mxu0 0.0
          %460 = vmatpush.msra.mxu0 0.0
          %461 = vmatpush.msra.mxu0 0.0
          %462 = vmatpush.msra.mxu0 0.0
          %463 = vmatpush.msra.mxu0 0.0
          %464 = vmatpush.msra.mxu0 0.0
          %465 = vmatpush.msra.mxu0 %v404
          %466 = vmatpush.msra.mxu0 %v403
          %467 = vmatmul.f32.gmra.mxu0 %v449
          %v468 = vpop.f32.mrf.mxu0
          %v469 = vadd.f32 0.0, %v468
          %470 = vdwg.mxu0
          %v471 = vmul.f32 %v469, 0.03125
          %v473 = vsel %vm447, %v445, 0
          %475 = vmatpush.msra.mxu0 0.0
          %476 = vmatpush.msra.mxu0 0.0
          %477 = vmatpush.msra.mxu0 0.0
          %478 = vmatpush.msra.mxu0 0.0
          %479 = vmatpush.msra.mxu0 0.0
          %480 = vmatpush.msra.mxu0 0.0
          %481 = vmatpush.msra.mxu0 0.0
          %482 = vmatpush.msra.mxu0 0.0
          %483 = vmatpush.msra.mxu0 0.0
          %484 = vmatpush.msra.mxu0 0.0
          %485 = vmatpush.msra.mxu0 0.0
          %486 = vmatpush.msra.mxu0 0.0
          %487 = vmatpush.msra.mxu0 0.0
          %488 = vmatpush.msra.mxu0 0.0
          %489 = vmatpush.msra.mxu0 %v404
          %490 = vmatpush.msra.mxu0 %v403
          %491 = vmatmul.f32.gmra.mxu0 %v473
          %v492 = vpop.f32.mrf.mxu0
          %v493 = vadd.f32 0.0, %v492
          %494 = vdwg.mxu0
          %v495 = vmul.f32 %v493, 0.03125
          %v496 = vmul.f32 %v471, %v471
          %v497 = vsub.f32 %v495, %v496
          %v498 = vmax.f32 %v497, 0.0
          %v499 = vld [vmem:[%s4] sm:$0x1]
          %v500 = vadd.f32 %v498, 1e-05
          %v501 = vrsqrt.pop %v500
          %v502 = vmul.f32 %v501, %v500
          %v503 = vmul.f32 %v502, %v501
          %v504 = vmul.f32 0.5, %v503
          %v505 = vsub.f32 1.5, %v504
          %v506 = vmul.f32 %v501, %v505
          %vm507 = vweird.f32 %v500
          %vm508 = vweird.f32 %v501
          %vm509 = vmor %vm507, %vm508
          %v510 = vsel %vm509, %v501, %v506
          %v511 = vmul.f32 %v499, %v510
          %512 = vst [vmem:[#allocation4] sm:$0x1] %v511
          %v513 = vld [vmem:[%s5] sm:$0x1]
          %v514 = vmul.f32 %v471, %v511
          %v515 = vsub.f32 %v513, %v514
          %516 = vst [vmem:[#allocation5] sm:$0x1] %v515
        $region56: #{tpu_custom_call.1} parent=43 // pred_fallthru
          _
        // Predicated region
        $region57: #{tpu_custom_call.1} parent=43 // pred_check
          %p517 = pneg %p382
        $region58: #{tpu_custom_call.1} parent=43 // pred_check_branch
          %519 = sbr.rel (%p517) target = $region60
        $region59: #{tpu_custom_call.1} parent=43 // pred_region
          %v520 = vld [vmem:[#allocation4] sm:$0x1]
          %v522 = vperm.slane %v520, 0
          %v524 = vmul.f32 %v353, %v522
          %v525 = vmul.f32 %v355, %v522
          %v526 = vld [vmem:[#allocation5] sm:$0x1]
          %v528 = vperm.slane %v526, 0
          %v530 = vadd.f32 %v524, %v528
          %v531 = vadd.f32 %v525, %v528
          %v532 = vpack.c.bf16 %v530, %v530
          %v533 = vpack.c.bf16 %v531, %v531
          %534 = vst [vmem:[%s278] sm:$0xf] %v532
          %535 = vst [vmem:[%s278 + $0x4] sm:$0xf] %v533
        $region60: #{tpu_custom_call.1} parent=43 // pred_fallthru
          _
        %s536 = sand.u32 %s184, 1
        %s537 = scalar_lea.sflag [#allocation7], %s536
        %s538 = sand.u32 %s184, 1
        %s539 = smul.addr %s538, 8
        %s540 = scalar_lea.vmem [#allocation6], %s539
        // Predicated region
        $region61: #{tpu_custom_call.1} parent=43 // pred_check
          %p541 = pneg %p194
        $region62: #{tpu_custom_call.1} parent=43 // pred_check_branch
          %543 = sbr.rel (%p541) target = $region64
        $region63: #{tpu_custom_call.1} parent=43 // pred_region
          %s544 = smul.u32 %s26, %s27
          %s545 = smul.u32 2, %s544
          %547 = vsyncadd %s537, 0
          %s548 = smul.addr %s25, 2
          %s549 = sadd.s32 %s545, %s548
          %s550 = smul.addr %s549, 4
          %s551 = scalar_lea.hbm %s6, %s550
          %s552 = sshll.u32 %s540, 4
          %s553 = int_to_ptr.vmem [resolvable:$true] %s552
          %s554 = sshll.u32 %s551, 4
          %s555 = int_to_ptr.hbm [resolvable:$true] %s554
          %560 = dma.vmem_to_hbm [thread:$0]  %s553, 128, %s555, %s537, 64, 64, 4
        $region64: #{tpu_custom_call.1} parent=43 // pred_fallthru
          _
      $region44: #{tpu_custom_call.1} parent=5 // pred_fallthru
        _
      %p561 = scmp.le.s32.totalorder 2, %s15
      // Predicated region
      $region65: #{tpu_custom_call.1} parent=5 // pred_check
        %p562 = pneg %p561
      $region66: #{tpu_custom_call.1} parent=5 // pred_check_branch
        %564 = sbr.rel (%p562) target = $region68
      $region67: #{tpu_custom_call.1} parent=5 // pred_region
        %s565 = ssub.s32 %s15, 2
        // Predicated region
        $region69: #{tpu_custom_call.1} parent=67 // pred_check
          %p566 = pneg %p200
        $region70: #{tpu_custom_call.1} parent=67 // pred_check_branch
          %568 = sbr.rel (%p566) target = $region72
        $region71: #{tpu_custom_call.1} parent=67 // pred_region
          %s569 = sand.u32 %s185, 1
          %s570 = scalar_lea.sflag [#allocation7], %s569
          %s571 = sand.u32 %s185, 1
          %s572 = smul.addr %s571, 8
          %s573 = scalar_lea.vmem [#allocation6], %s572
          %575 = dma.done %s570, 128
        $region72: #{tpu_custom_call.1} parent=67 // pred_fallthru
          _
      $region68: #{tpu_custom_call.1} parent=5 // pred_fallthru
        _
    $region6: #{tpu_custom_call.1} parent=1 // loop_footer
      %s19 = sadd.s32 1, %s15
    $region7: #{tpu_custom_call.1} parent=1 // loop_footer_branch
      %14 = sbr.rel target = $region3
    $region8: #{tpu_custom_call.1} parent=1 // loop_exit
      _
    %576 = vsyncpa [#allocation7], 1
    %s577 = scalar_lea.sflag [#allocation7], 1
    %578 = vsyncpa %s577, 1

</llo_original>
